<compile_context>
chip_gen: v5e
topology: v5e:2x2
jax: 0.10.0
libtpu: 0.0.40
codegen_flags: <defaults>
</compile_context>

<pallas_src>
import functools

import jax
import jax.numpy as jnp
from jax.experimental import pallas as pl
from jax.experimental.pallas import tpu as pltpu


# (lane offset, J=out_features, K=in_features) of each layer's weight block
# inside the packed (8, 128) parameter slab.  The bias sits in the lane right
# after the weight block: b_l = slab[0:J, off + K].
_LAYER_LAYOUT = ((0, 6, 8), (16, 4, 6), (32, 1, 4))


def _dense(p_ref, h, off, j, k):
    """y = W @ h + b with W = slab[0:j, off:off+k], b = slab[0:j, off+k]."""
    w = p_ref[0:j, off:off + k]                  # (j, k)  tiny, vreg-resident
    b = p_ref[0:j, off + k:off + k + 1]          # (j, 1)
    acc = jnp.broadcast_to(b, (j, h.shape[1]))   # bias fused into the init
    # Unrolled broadcast-FMA on the VPU: each step is a (j,1) x (1,B)
    # outer-product-style multiply-add over the full lane width.
    for kk in range(k):
        acc = acc + w[:, kk:kk + 1] * h[kk:kk + 1, :]
    return acc


def mlp_kernel(p_ref, x_ref, o_ref):
    x = x_ref[...]                               # (8, B), dtype passed through
    (o1, j1, k1), (o2, j2, k2), (o3, j3, k3) = _LAYER_LAYOUT
    # jax.nn.sigmoid -> exp + reciprocal, both on the otherwise-idle EUP slot.
    h1 = jax.nn.sigmoid(_dense(p_ref, x, o1, j1, k1))    # (6, B)
    h2 = jax.nn.sigmoid(_dense(p_ref, h1, o2, j2, k2))   # (4, B)
    h3 = jax.nn.sigmoid(_dense(p_ref, h2, o3, j3, k3))   # (1, B)
    o_ref[...] = h3.astype(o_ref.dtype)


def _round_up(a, b):
    return (a + b - 1) // b * b


@functools.partial(jax.jit, static_argnames=("block_n",))
def mlp_forward(x, param_slab, *, block_n=8192):
    """x: (N, 8) row-major (PyTorch convention).  Returns (N, 1)."""
    n, d = x.shape
    assert d == 8
    xt = x.T                                     # (8, N): batch -> lanes
    block = min(block_n, _round_up(n, 128))      # lane-aligned batch tile
    n_pad = _round_up(n, block)
    if n_pad != n:
        xt = jnp.pad(xt, ((0, 0), (0, n_pad - n)))
    grid = (n_pad // block,)

    out = pl.pallas_call(
        mlp_kernel,
        out_shape=jax.ShapeDtypeStruct((1, n_pad), x.dtype),
        grid_spec=pltpu.PrefetchScalarGridSpec(
            num_scalar_prefetch=0,
            grid=grid,
            in_specs=[
                # Parameter slab: one 4 KiB tile, constant index_map ->
                # fetched once, resident across all batch steps.
                pl.BlockSpec((8, 128), lambda i: (0, 0)),
                # Activations: (8, block) f32 = 32 B per batch row; double-
                # buffered tiles stay far below scoped VMEM on v5e/v6e/v7x.
                pl.BlockSpec((8, block), lambda i: (0, i)),
            ],
            out_specs=pl.BlockSpec((1, block), lambda i: (0, i)),
        ),
        compiler_params=pltpu.CompilerParams(
            # Pure data-parallel batch axis -> megacore / v7x 2-TC sharding.
            dimension_semantics=("parallel",),
        ),
    )(param_slab, xt)

    return out[:, :n].T                          # back to the (N, 1) convention


def init_params(key):
    """torch.nn.Linear-style params: weight (out, in), bias (out,)."""
    dims = [(8, 6), (6, 4), (4, 1)]
    params = []
    for fan_in, fan_out in dims:
        key, kw, kb = jax.random.split(key, 3)
        bound = float(fan_in) ** -0.5
        w = jax.random.uniform(kw, (fan_out, fan_in), jnp.float32, -bound, bound)
        b = jax.random.uniform(kb, (fan_out,), jnp.float32, -bound, bound)
        params.append((w, b))
    return params


def pack_params(params):
    """Pack all six tensors into a single (8, 128) f32 slab (one DMA)."""
    slab = jnp.zeros((8, 128), jnp.float32)
    for (off, j, k), (w, b) in zip(_LAYER_LAYOUT, params):
        slab = slab.at[0:j, off:off + k].set(w)
        slab = slab.at[0:j, off + k].set(b)
    return slab


def reference_forward(x, params):
    h = x
    for w, b in params:                          # w is (out, in), torch layout
        h = jax.nn.sigmoid(h @ w.T + b)
    return h


if __name__ == "__main__":
    key = jax.random.PRNGKey(0)
    kx, kp = jax.random.split(key)

    batch = 8
    x = jax.random.normal(kx, (batch, 8), dtype=jnp.float32)
    params = init_params(kp)
    slab = pack_params(params)

    out = jax.block_until_ready(mlp_forward(x, slab))
    ref = reference_forward(x, params)

    assert out.shape == (batch, 1)
    assert jnp.allclose(out, ref, atol=1e-5, rtol=1e-5)

    print("KERNEL_OK")
</pallas_src>

<mosaic_0001>
module attributes {stable_mosaic.version = 11 : i64} {
  func.func @mlp_kernel(%arg0: i32, %arg1: memref<8x128xf32, #tpu.memory_space<vmem>>, %arg2: memref<8x128xf32, #tpu.memory_space<vmem>>, %arg3: memref<1x128xf32, #tpu.memory_space<vmem>>) attributes {dimension_semantics = [#tpu.dimension_semantics<parallel>], iteration_bounds = array<i64: 1>, scalar_prefetch = 0 : i64, scratch_operands = 0 : i64, tpu.core_type = #tpu.core_type<tc>, window_params = [{pipeline_mode = #tpu.pipeline_mode<synchronous>, transform_indices = @transform_0, window_bounds = array<i64: 8, 128>}, {transform_indices = @transform_1, window_bounds = array<i64: 8, 128>}, {transform_indices = @transform_2, window_bounds = array<i64: 1, 128>}]} {
    %c0 = arith.constant 0 : index
    %c0_0 = arith.constant 0 : index
    %0 = vector.load %arg2[%c0, %c0_0] : memref<8x128xf32, #tpu.memory_space<vmem>>, vector<8x128xf32>
    %c0_1 = arith.constant 0 : index
    %c0_2 = arith.constant 0 : index
    %1 = vector.load %arg1[%c0_1, %c0_2] : memref<8x128xf32, #tpu.memory_space<vmem>>, vector<6x8xf32>
    %c0_3 = arith.constant 0 : index
    %c8 = arith.constant 8 : index
    %2 = vector.load %arg1[%c0_3, %c8] : memref<8x128xf32, #tpu.memory_space<vmem>>, vector<6x1xf32>
    %3 = vector.shape_cast %2 : vector<6x1xf32> to vector<6x1xf32>
    %4 = vector.broadcast %3 : vector<6x1xf32> to vector<6x128xf32>
    %5 = vector.extract_strided_slice %1 {offsets = [0, 0], sizes = [6, 1], strides = [1, 1]} : vector<6x8xf32> to vector<6x1xf32>
    %6 = vector.extract_strided_slice %0 {offsets = [0, 0], sizes = [1, 128], strides = [1, 1]} : vector<8x128xf32> to vector<1x128xf32>
    %7 = vector.broadcast %5 : vector<6x1xf32> to vector<6x128xf32>
    %8 = vector.broadcast %6 : vector<1x128xf32> to vector<6x128xf32>
    %9 = arith.mulf %7, %8 : vector<6x128xf32>
    %10 = arith.addf %4, %9 : vector<6x128xf32>
    %11 = vector.extract_strided_slice %1 {offsets = [0, 1], sizes = [6, 1], strides = [1, 1]} : vector<6x8xf32> to vector<6x1xf32>
    %12 = vector.extract_strided_slice %0 {offsets = [1, 0], sizes = [1, 128], strides = [1, 1]} : vector<8x128xf32> to vector<1x128xf32>
    %13 = vector.broadcast %11 : vector<6x1xf32> to vector<6x128xf32>
    %14 = vector.broadcast %12 : vector<1x128xf32> to vector<6x128xf32>
    %15 = arith.mulf %13, %14 : vector<6x128xf32>
    %16 = arith.addf %10, %15 : vector<6x128xf32>
    %17 = vector.extract_strided_slice %1 {offsets = [0, 2], sizes = [6, 1], strides = [1, 1]} : vector<6x8xf32> to vector<6x1xf32>
    %18 = vector.extract_strided_slice %0 {offsets = [2, 0], sizes = [1, 128], strides = [1, 1]} : vector<8x128xf32> to vector<1x128xf32>
    %19 = vector.broadcast %17 : vector<6x1xf32> to vector<6x128xf32>
    %20 = vector.broadcast %18 : vector<1x128xf32> to vector<6x128xf32>
    %21 = arith.mulf %19, %20 : vector<6x128xf32>
    %22 = arith.addf %16, %21 : vector<6x128xf32>
    %23 = vector.extract_strided_slice %1 {offsets = [0, 3], sizes = [6, 1], strides = [1, 1]} : vector<6x8xf32> to vector<6x1xf32>
    %24 = vector.extract_strided_slice %0 {offsets = [3, 0], sizes = [1, 128], strides = [1, 1]} : vector<8x128xf32> to vector<1x128xf32>
    %25 = vector.broadcast %23 : vector<6x1xf32> to vector<6x128xf32>
    %26 = vector.broadcast %24 : vector<1x128xf32> to vector<6x128xf32>
    %27 = arith.mulf %25, %26 : vector<6x128xf32>
    %28 = arith.addf %22, %27 : vector<6x128xf32>
    %29 = vector.extract_strided_slice %1 {offsets = [0, 4], sizes = [6, 1], strides = [1, 1]} : vector<6x8xf32> to vector<6x1xf32>
    %30 = vector.extract_strided_slice %0 {offsets = [4, 0], sizes = [1, 128], strides = [1, 1]} : vector<8x128xf32> to vector<1x128xf32>
    %31 = vector.broadcast %29 : vector<6x1xf32> to vector<6x128xf32>
    %32 = vector.broadcast %30 : vector<1x128xf32> to vector<6x128xf32>
    %33 = arith.mulf %31, %32 : vector<6x128xf32>
    %34 = arith.addf %28, %33 : vector<6x128xf32>
    %35 = vector.extract_strided_slice %1 {offsets = [0, 5], sizes = [6, 1], strides = [1, 1]} : vector<6x8xf32> to vector<6x1xf32>
    %36 = vector.extract_strided_slice %0 {offsets = [5, 0], sizes = [1, 128], strides = [1, 1]} : vector<8x128xf32> to vector<1x128xf32>
    %37 = vector.broadcast %35 : vector<6x1xf32> to vector<6x128xf32>
    %38 = vector.broadcast %36 : vector<1x128xf32> to vector<6x128xf32>
    %39 = arith.mulf %37, %38 : vector<6x128xf32>
    %40 = arith.addf %34, %39 : vector<6x128xf32>
    %41 = vector.extract_strided_slice %1 {offsets = [0, 6], sizes = [6, 1], strides = [1, 1]} : vector<6x8xf32> to vector<6x1xf32>
    %42 = vector.extract_strided_slice %0 {offsets = [6, 0], sizes = [1, 128], strides = [1, 1]} : vector<8x128xf32> to vector<1x128xf32>
    %43 = vector.broadcast %41 : vector<6x1xf32> to vector<6x128xf32>
    %44 = vector.broadcast %42 : vector<1x128xf32> to vector<6x128xf32>
    %45 = arith.mulf %43, %44 : vector<6x128xf32>
    %46 = arith.addf %40, %45 : vector<6x128xf32>
    %47 = vector.extract_strided_slice %1 {offsets = [0, 7], sizes = [6, 1], strides = [1, 1]} : vector<6x8xf32> to vector<6x1xf32>
    %48 = vector.extract_strided_slice %0 {offsets = [7, 0], sizes = [1, 128], strides = [1, 1]} : vector<8x128xf32> to vector<1x128xf32>
    %49 = vector.broadcast %47 : vector<6x1xf32> to vector<6x128xf32>
    %50 = vector.broadcast %48 : vector<1x128xf32> to vector<6x128xf32>
    %51 = arith.mulf %49, %50 : vector<6x128xf32>
    %52 = arith.addf %46, %51 : vector<6x128xf32>
    %53 = arith.negf %52 : vector<6x128xf32>
    %54 = math.exp %53 : vector<6x128xf32>
    %cst = arith.constant 1.000000e+00 : f32
    %55 = vector.broadcast %cst : f32 to vector<6x128xf32>
    %56 = arith.addf %55, %54 : vector<6x128xf32>
    %57 = arith.divf %55, %56 : vector<6x128xf32>
    %c0_4 = arith.constant 0 : index
    %c16 = arith.constant 16 : index
    %58 = vector.load %arg1[%c0_4, %c16] : memref<8x128xf32, #tpu.memory_space<vmem>>, vector<4x6xf32>
    %c0_5 = arith.constant 0 : index
    %c22 = arith.constant 22 : index
    %59 = vector.load %arg1[%c0_5, %c22] : memref<8x128xf32, #tpu.memory_space<vmem>>, vector<4x1xf32>
    %60 = vector.shape_cast %59 : vector<4x1xf32> to vector<4x1xf32>
    %61 = vector.broadcast %60 : vector<4x1xf32> to vector<4x128xf32>
    %62 = vector.extract_strided_slice %58 {offsets = [0, 0], sizes = [4, 1], strides = [1, 1]} : vector<4x6xf32> to vector<4x1xf32>
    %63 = vector.extract_strided_slice %57 {offsets = [0, 0], sizes = [1, 128], strides = [1, 1]} : vector<6x128xf32> to vector<1x128xf32>
    %64 = vector.broadcast %62 : vector<4x1xf32> to vector<4x128xf32>
    %65 = vector.broadcast %63 : vector<1x128xf32> to vector<4x128xf32>
    %66 = arith.mulf %64, %65 : vector<4x128xf32>
    %67 = arith.addf %61, %66 : vector<4x128xf32>
    %68 = vector.extract_strided_slice %58 {offsets = [0, 1], sizes = [4, 1], strides = [1, 1]} : vector<4x6xf32> to vector<4x1xf32>
    %69 = vector.extract_strided_slice %57 {offsets = [1, 0], sizes = [1, 128], strides = [1, 1]} : vector<6x128xf32> to vector<1x128xf32>
    %70 = vector.broadcast %68 : vector<4x1xf32> to vector<4x128xf32>
    %71 = vector.broadcast %69 : vector<1x128xf32> to vector<4x128xf32>
    %72 = arith.mulf %70, %71 : vector<4x128xf32>
    %73 = arith.addf %67, %72 : vector<4x128xf32>
    %74 = vector.extract_strided_slice %58 {offsets = [0, 2], sizes = [4, 1], strides = [1, 1]} : vector<4x6xf32> to vector<4x1xf32>
    %75 = vector.extract_strided_slice %57 {offsets = [2, 0], sizes = [1, 128], strides = [1, 1]} : vector<6x128xf32> to vector<1x128xf32>
    %76 = vector.broadcast %74 : vector<4x1xf32> to vector<4x128xf32>
    %77 = vector.broadcast %75 : vector<1x128xf32> to vector<4x128xf32>
    %78 = arith.mulf %76, %77 : vector<4x128xf32>
    %79 = arith.addf %73, %78 : vector<4x128xf32>
    %80 = vector.extract_strided_slice %58 {offsets = [0, 3], sizes = [4, 1], strides = [1, 1]} : vector<4x6xf32> to vector<4x1xf32>
    %81 = vector.extract_strided_slice %57 {offsets = [3, 0], sizes = [1, 128], strides = [1, 1]} : vector<6x128xf32> to vector<1x128xf32>
    %82 = vector.broadcast %80 : vector<4x1xf32> to vector<4x128xf32>
    %83 = vector.broadcast %81 : vector<1x128xf32> to vector<4x128xf32>
    %84 = arith.mulf %82, %83 : vector<4x128xf32>
    %85 = arith.addf %79, %84 : vector<4x128xf32>
    %86 = vector.extract_strided_slice %58 {offsets = [0, 4], sizes = [4, 1], strides = [1, 1]} : vector<4x6xf32> to vector<4x1xf32>
    %87 = vector.extract_strided_slice %57 {offsets = [4, 0], sizes = [1, 128], strides = [1, 1]} : vector<6x128xf32> to vector<1x128xf32>
    %88 = vector.broadcast %86 : vector<4x1xf32> to vector<4x128xf32>
    %89 = vector.broadcast %87 : vector<1x128xf32> to vector<4x128xf32>
    %90 = arith.mulf %88, %89 : vector<4x128xf32>
    %91 = arith.addf %85, %90 : vector<4x128xf32>
    %92 = vector.extract_strided_slice %58 {offsets = [0, 5], sizes = [4, 1], strides = [1, 1]} : vector<4x6xf32> to vector<4x1xf32>
    %93 = vector.extract_strided_slice %57 {offsets = [5, 0], sizes = [1, 128], strides = [1, 1]} : vector<6x128xf32> to vector<1x128xf32>
    %94 = vector.broadcast %92 : vector<4x1xf32> to vector<4x128xf32>
    %95 = vector.broadcast %93 : vector<1x128xf32> to vector<4x128xf32>
    %96 = arith.mulf %94, %95 : vector<4x128xf32>
    %97 = arith.addf %91, %96 : vector<4x128xf32>
    %98 = arith.negf %97 : vector<4x128xf32>
    %99 = math.exp %98 : vector<4x128xf32>
    %cst_6 = arith.constant 1.000000e+00 : f32
    %100 = vector.broadcast %cst_6 : f32 to vector<4x128xf32>
    %101 = arith.addf %100, %99 : vector<4x128xf32>
    %102 = arith.divf %100, %101 : vector<4x128xf32>
    %c0_7 = arith.constant 0 : index
    %c32 = arith.constant 32 : index
    %103 = vector.load %arg1[%c0_7, %c32] : memref<8x128xf32, #tpu.memory_space<vmem>>, vector<1x4xf32>
    %c0_8 = arith.constant 0 : index
    %c36 = arith.constant 36 : index
    %104 = vector.load %arg1[%c0_8, %c36] : memref<8x128xf32, #tpu.memory_space<vmem>>, vector<1x1xf32>
    %105 = vector.shape_cast %104 : vector<1x1xf32> to vector<1x1xf32>
    %106 = vector.broadcast %105 : vector<1x1xf32> to vector<1x128xf32>
    %107 = vector.extract_strided_slice %103 {offsets = [0, 0], sizes = [1, 1], strides = [1, 1]} : vector<1x4xf32> to vector<1x1xf32>
    %108 = vector.extract_strided_slice %102 {offsets = [0, 0], sizes = [1, 128], strides = [1, 1]} : vector<4x128xf32> to vector<1x128xf32>
    %109 = vector.broadcast %107 : vector<1x1xf32> to vector<1x128xf32>
    %110 = arith.mulf %109, %108 : vector<1x128xf32>
    %111 = arith.addf %106, %110 : vector<1x128xf32>
    %112 = vector.extract_strided_slice %103 {offsets = [0, 1], sizes = [1, 1], strides = [1, 1]} : vector<1x4xf32> to vector<1x1xf32>
    %113 = vector.extract_strided_slice %102 {offsets = [1, 0], sizes = [1, 128], strides = [1, 1]} : vector<4x128xf32> to vector<1x128xf32>
    %114 = vector.broadcast %112 : vector<1x1xf32> to vector<1x128xf32>
    %115 = arith.mulf %114, %113 : vector<1x128xf32>
    %116 = arith.addf %111, %115 : vector<1x128xf32>
    %117 = vector.extract_strided_slice %103 {offsets = [0, 2], sizes = [1, 1], strides = [1, 1]} : vector<1x4xf32> to vector<1x1xf32>
    %118 = vector.extract_strided_slice %102 {offsets = [2, 0], sizes = [1, 128], strides = [1, 1]} : vector<4x128xf32> to vector<1x128xf32>
    %119 = vector.broadcast %117 : vector<1x1xf32> to vector<1x128xf32>
    %120 = arith.mulf %119, %118 : vector<1x128xf32>
    %121 = arith.addf %116, %120 : vector<1x128xf32>
    %122 = vector.extract_strided_slice %103 {offsets = [0, 3], sizes = [1, 1], strides = [1, 1]} : vector<1x4xf32> to vector<1x1xf32>
    %123 = vector.extract_strided_slice %102 {offsets = [3, 0], sizes = [1, 128], strides = [1, 1]} : vector<4x128xf32> to vector<1x128xf32>
    %124 = vector.broadcast %122 : vector<1x1xf32> to vector<1x128xf32>
    %125 = arith.mulf %124, %123 : vector<1x128xf32>
    %126 = arith.addf %121, %125 : vector<1x128xf32>
    %127 = arith.negf %126 : vector<1x128xf32>
    %128 = math.exp %127 : vector<1x128xf32>
    %cst_9 = arith.constant 1.000000e+00 : f32
    %129 = vector.broadcast %cst_9 : f32 to vector<1x128xf32>
    %130 = arith.addf %129, %128 : vector<1x128xf32>
    %131 = arith.divf %129, %130 : vector<1x128xf32>
    %c0_10 = arith.constant 0 : index
    %c0_11 = arith.constant 0 : index
    %132 = vector.load %arg3[%c0_10, %c0_11] : memref<1x128xf32, #tpu.memory_space<vmem>>, vector<1x128xf32>
    tpu.vector_store %arg3[%c0_10, %c0_11], %131 {strides = array<i32>} : memref<1x128xf32, #tpu.memory_space<vmem>>, vector<1x128xf32>,
    return
  }
  func.func @transform_0(%arg0: i32) -> (i32, i32) {
    %c0_i32 = arith.constant 0 : i32
    %c0_i32_0 = arith.constant 0 : i32
    %c0_i32_1 = arith.constant 0 : i32
    return %c0_i32, %c0_i32_0 : i32, i32
  }
  func.func @transform_1(%arg0: i32) -> (i32, i32) {
    %c0_i32 = arith.constant 0 : i32
    %c0_i32_0 = arith.constant 0 : i32
    return %c0_i32, %arg0 : i32, i32
  }
  func.func @transform_2(%arg0: i32) -> (i32, i32) {
    %c0_i32 = arith.constant 0 : i32
    %c0_i32_0 = arith.constant 0 : i32
    return %c0_i32, %arg0 : i32, i32
  }
}

</mosaic_0001>

<llo_original>
// kernel: mlp_forward.1
$region0: #{mlp_forward.1}
  #allocation0 [shape = 'u32[]', space=smem, size = 0x4, offset = 0x4, fixed_abs, tag = 'smem constant byte address 0x4 - core index']
  #allocation1 [shape = 'u32[72,128]{1,0:T(1,128)}', space=vmem, size = 0x9000, scoped, tag = 'internal scratch']
  %s0 = inlined_call_operand.vmem [shape: f32[8,128], index: 0, kind: input, shape index: {}]
  %s1 = inlined_call_operand.vmem [shape: f32[8,128], index: 1, kind: input, shape index: {}]
  %s2 = inlined_call_operand.vmem [shape: f32[1,128], index: 2, kind: output, shape index: {}]
  %s3 = sld [smem:[#allocation0]]
  $region18: #{mlp_forward.1} parent=0
    _
  %s5 = ssub.s32 1, %s3
  %s6 = scalar_select 0, %s5, %s3
  // Predicated region
  $region2: #{mlp_forward.1} parent=0 // pred_check
    _
  $region3: #{mlp_forward.1} parent=0 // pred_check_branch
    %8 = sbr.rel (0) target = $region5
  $region4: #{mlp_forward.1} parent=0 // pred_region
    _
  $region5: #{mlp_forward.1} parent=0 // pred_fallthru
    _
  // Predicated region
  $region6: #{mlp_forward.1} parent=0 // pred_check
    _
  $region7: #{mlp_forward.1} parent=0 // pred_check_branch
    %10 = sbr.rel (0) target = $region9
  $region8: #{mlp_forward.1} parent=0 // pred_region
    _
  $region9: #{mlp_forward.1} parent=0 // pred_fallthru
    _
  %v11 = vld [vmem:[%s1] sm:$0xff]
  %v12 = vld [vmem:[%s0] sm:$0x3f]
  %14 = vset.pattern.permute.xlu0 8
  %15 = vperm.xlu0 %14, %v12
  %v16 = vpop.permute.xlu0 %15
  %18 = vset.pattern.permute.xlu0 0
  %19 = vperm.xlu0 %18, %v12
  %v20 = vpop.permute.xlu0 %19
  %v22 = vperm.slane %v11, 0
  %v23 = vmul.f32 %v20, %v22
  %v24 = vadd.f32 %v16, %v23
  %25 = vset.pattern.permute.xlu0 1
  %26 = vperm.xlu0 %25, %v12
  %v27 = vpop.permute.xlu0 %26
  %v29 = vperm.slane %v11, 1
  %v30 = vmul.f32 %v27, %v29
  %v31 = vadd.f32 %v24, %v30
  %32 = vset.pattern.permute.xlu0 2
  %33 = vperm.xlu0 %32, %v12
  %v34 = vpop.permute.xlu0 %33
  %v36 = vperm.slane %v11, 2
  %v37 = vmul.f32 %v34, %v36
  %v38 = vadd.f32 %v31, %v37
  %39 = vset.pattern.permute.xlu0 3
  %40 = vperm.xlu0 %39, %v12
  %v41 = vpop.permute.xlu0 %40
  %v43 = vperm.slane %v11, 3
  %v44 = vmul.f32 %v41, %v43
  %v45 = vadd.f32 %v38, %v44
  %46 = vset.pattern.permute.xlu0 4
  %47 = vperm.xlu0 %46, %v12
  %v48 = vpop.permute.xlu0 %47
  %v50 = vperm.slane %v11, 4
  %v51 = vmul.f32 %v48, %v50
  %v52 = vadd.f32 %v45, %v51
  %53 = vset.pattern.permute.xlu0 5
  %54 = vperm.xlu0 %53, %v12
  %v55 = vpop.permute.xlu0 %54
  %v57 = vperm.slane %v11, 5
  %v58 = vmul.f32 %v55, %v57
  %v59 = vadd.f32 %v52, %v58
  %60 = vset.pattern.permute.xlu0 6
  %61 = vperm.xlu0 %60, %v12
  %v62 = vpop.permute.xlu0 %61
  %v64 = vperm.slane %v11, 6
  %v65 = vmul.f32 %v62, %v64
  %v66 = vadd.f32 %v59, %v65
  %67 = vset.pattern.permute.xlu0 7
  %68 = vperm.xlu0 %67, %v12
  %v69 = vpop.permute.xlu0 %68
  %v71 = vperm.slane %v11, 7
  %v72 = vmul.f32 %v69, %v71
  %v73 = vadd.f32 %v66, %v72
  %v74 = vxor.u32 %v73, 2147483648
  %v75 = vmul.f32 %v74, 1.442695
  %v76 = vpow.pop %v75
  %v77 = vadd.f32 %v76, 1.0
  %v78 = vrcp.pop %v77
  %v79 = vmul.f32 %v77, %v78
  %v80 = vsub.f32 1.0, %v79
  %v81 = vmul.f32 %v78, %v80
  %v82 = vadd.f32 %v78, %v81
  %vm83 = vweird.f32 %v77
  %vm84 = vweird.f32 %v78
  %vm85 = vmor %vm83, %vm84
  %v86 = vsel %vm85, %v78, %v82
  %v87 = vand.u32 2147483647, %v77
  %vm88 = vcmp.eq.f32.partialorder %v87, 8.507059e+37
  %v89 = vand.u32 %v77, 2147483648
  %v90 = vor.u32 1.1754944e-38, %v89
  %v91 = vsel %vm88, %v90, %v86
  %v92 = vmul.f32 1.0, %v91
  %v93 = vld [vmem:[%s0] sm:$0xf]
  %95 = vset.pattern.permute.xlu0 22
  %96 = vperm.xlu0 %95, %v93
  %v97 = vpop.permute.xlu0 %96
  %99 = vset.pattern.permute.xlu0 16
  %100 = vperm.xlu0 %99, %v93
  %v101 = vpop.permute.xlu0 %100
  %v103 = vperm.slane %v92, 0
  %v104 = vmul.f32 %v101, %v103
  %v105 = vadd.f32 %v97, %v104
  %106 = vset.pattern.permute.xlu0 17
  %107 = vperm.xlu0 %106, %v93
  %v108 = vpop.permute.xlu0 %107
  %v110 = vperm.slane %v92, 1
  %v111 = vmul.f32 %v108, %v110
  %v112 = vadd.f32 %v105, %v111
  %113 = vset.pattern.permute.xlu0 18
  %114 = vperm.xlu0 %113, %v93
  %v115 = vpop.permute.xlu0 %114
  %v117 = vperm.slane %v92, 2
  %v118 = vmul.f32 %v115, %v117
  %v119 = vadd.f32 %v112, %v118
  %120 = vset.pattern.permute.xlu0 19
  %121 = vperm.xlu0 %120, %v93
  %v122 = vpop.permute.xlu0 %121
  %v124 = vperm.slane %v92, 3
  %v125 = vmul.f32 %v122, %v124
  %v126 = vadd.f32 %v119, %v125
  %127 = vset.pattern.permute.xlu0 20
  %128 = vperm.xlu0 %127, %v93
  %v129 = vpop.permute.xlu0 %128
  %v131 = vperm.slane %v92, 4
  %v132 = vmul.f32 %v129, %v131
  %v133 = vadd.f32 %v126, %v132
  %134 = vset.pattern.permute.xlu0 21
  %135 = vperm.xlu0 %134, %v93
  %v136 = vpop.permute.xlu0 %135
  %v138 = vperm.slane %v92, 5
  %v139 = vmul.f32 %v136, %v138
  %v140 = vadd.f32 %v133, %v139
  %v141 = vxor.u32 %v140, 2147483648
  %v142 = vmul.f32 %v141, 1.442695
  %v143 = vpow.pop %v142
  %v144 = vadd.f32 %v143, 1.0
  %v145 = vrcp.pop %v144
  %v146 = vmul.f32 %v144, %v145
  %v147 = vsub.f32 1.0, %v146
  %v148 = vmul.f32 %v145, %v147
  %v149 = vadd.f32 %v145, %v148
  %vm150 = vweird.f32 %v144
  %vm151 = vweird.f32 %v145
  %vm152 = vmor %vm150, %vm151
  %v153 = vsel %vm152, %v145, %v149
  %v154 = vand.u32 2147483647, %v144
  %vm155 = vcmp.eq.f32.partialorder %v154, 8.507059e+37
  %v156 = vand.u32 %v144, 2147483648
  %v157 = vor.u32 1.1754944e-38, %v156
  %v158 = vsel %vm155, %v157, %v153
  %v159 = vmul.f32 1.0, %v158
  %v160 = vld [vmem:[%s0] sm:$0x1]
  %162 = vset.pattern.permute.xlu0 36
  %163 = vperm.xlu0 %162, %v160
  %v164 = vpop.permute.xlu0 %163
  %166 = vset.pattern.permute.xlu0 32
  %167 = vperm.xlu0 %166, %v160
  %v168 = vpop.permute.xlu0 %167
  %v170 = vmul.f32 %v168, %v159
  %v171 = vadd.f32 %v164, %v170
  %172 = vset.pattern.permute.xlu0 33
  %173 = vperm.xlu0 %172, %v160
  %v174 = vpop.permute.xlu0 %173
  %v177 = vrot.slane %v159, 1
  %v179 = vmul.f32 %v174, %v177
  %v180 = vadd.f32 %v171, %v179
  %181 = vset.pattern.permute.xlu0 34
  %182 = vperm.xlu0 %181, %v160
  %v183 = vpop.permute.xlu0 %182
  %v185 = vrot.slane %v159, 2
  %v187 = vmul.f32 %v183, %v185
  %v188 = vadd.f32 %v180, %v187
  %189 = vset.pattern.permute.xlu0 35
  %190 = vperm.xlu0 %189, %v160
  %v191 = vpop.permute.xlu0 %190
  %v193 = vrot.slane %v159, 3
  %v195 = vmul.f32 %v191, %v193
  %v196 = vadd.f32 %v188, %v195
  %v197 = vxor.u32 %v196, 2147483648
  %v198 = vmul.f32 %v197, 1.442695
  %v199 = vpow.pop %v198
  %v200 = vadd.f32 %v199, 1.0
  %v201 = vrcp.pop %v200
  %v202 = vmul.f32 %v200, %v201
  %v203 = vsub.f32 1.0, %v202
  %v204 = vmul.f32 %v201, %v203
  %v205 = vadd.f32 %v201, %v204
  %vm206 = vweird.f32 %v200
  %vm207 = vweird.f32 %v201
  %vm208 = vmor %vm206, %vm207
  %v209 = vsel %vm208, %v201, %v205
  %v210 = vand.u32 2147483647, %v200
  %vm211 = vcmp.eq.f32.partialorder %v210, 8.507059e+37
  %v212 = vand.u32 %v200, 2147483648
  %v213 = vor.u32 1.1754944e-38, %v212
  %v214 = vsel %vm211, %v213, %v209
  %v215 = vmul.f32 1.0, %v214
  %216 = vst [vmem:[%s2] sm:$0x1] %v215
  // Predicated region
  $region10: #{mlp_forward.1} parent=0 // pred_check
    _
  $region11: #{mlp_forward.1} parent=0 // pred_check_branch
    %218 = sbr.rel (0) target = $region13
  $region12: #{mlp_forward.1} parent=0 // pred_region
    _
  $region13: #{mlp_forward.1} parent=0 // pred_fallthru
    _
  // Predicated region
  $region14: #{mlp_forward.1} parent=0 // pred_check
    _
  $region15: #{mlp_forward.1} parent=0 // pred_check_branch
    %220 = sbr.rel (0) target = $region17
  $region16: #{mlp_forward.1} parent=0 // pred_region
    _
  $region17: #{mlp_forward.1} parent=0 // pred_fallthru
    _

</llo_original>
